<compile_context>
chip_gen: v7x
topology: tpu7x:2x2x1
jax: 0.10.0
libtpu: 0.0.40
codegen_flags: <defaults>
</compile_context>

<pallas_src>
import jax
import jax.numpy as jnp
import numpy as np
from jax.experimental import pallas as pl
from jax.experimental.pallas import tpu as pltpu


def nnkernel_kernel(xy_ref, p1_ref, w2_ref, b2_ref, p3_ref, o_ref):
    # xy_ref: (2, tm)            rows = [x; y], points along lanes
    # p1_ref: (nk, 3)            columns = [w1_x | w1_y | b1]
    # w2_ref: (nk, nk)           layer2 weight
    # b2_ref: (nk, 1)            layer2 bias (broadcast across lanes)
    # p3_ref: (1, nk + 1)        [w3 | b3]
    # o_ref : (1, tm)            lane-dense output row
    nk = w2_ref.shape[0]

    x = xy_ref[0:1, :]                          # (1, tm)
    y = xy_ref[1:2, :]                          # (1, tm)

    p1 = p1_ref[...]
    # TODO(synk): activation is an arbitrary callable in the PyTorch module;
    # the default torch.tanh is hard-coded here.
    z = jnp.tanh(p1[:, 0:1] * x + p1[:, 1:2] * y + p1[:, 2:3])         # (nk, tm)

    z = jnp.dot(w2_ref[...], z, preferred_element_type=jnp.float32)    # (nk, tm)
    z = jnp.tanh(z + b2_ref[...])

    p3 = p3_ref[...]
    out = jnp.dot(p3[:, :nk], z, preferred_element_type=jnp.float32)   # (1, tm)
    out = out + p3[:, nk:nk + 1]
    o_ref[...] = out.astype(o_ref.dtype)


def nnkernel_forward(x, y, w1, b1, w2, b2, w3, b3, *, tm=256):
    """Pallas implementation of NNKernel.forward.

    x, y: arrays of identical (arbitrary) shape
    w1: (n_kernel, 2), b1: (n_kernel,)     -- layer1
    w2: (n_kernel, n_kernel), b2: (n_kernel,)  -- layer2
    w3: (1, n_kernel), b3: (1,)            -- layer3
    """
    orig_shape = x.shape
    xf = jnp.ravel(jnp.asarray(x, jnp.float32))
    yf = jnp.ravel(jnp.asarray(y, jnp.float32))
    M = xf.shape[0]
    nk = w1.shape[0]

    grid_m = pl.cdiv(M, tm)
    m_pad = grid_m * tm
    if m_pad != M:
        xf = jnp.pad(xf, (0, m_pad - M))
        yf = jnp.pad(yf, (0, m_pad - M))

    xy = jnp.stack([xf, yf], axis=0)                                    # (2, m_pad)
    p1 = jnp.concatenate(
        [jnp.asarray(w1, jnp.float32),
         jnp.asarray(b1, jnp.float32).reshape(nk, 1)], axis=1)          # (nk, 3)
    w2c = jnp.asarray(w2, jnp.float32)                                  # (nk, nk)
    b2c = jnp.asarray(b2, jnp.float32).reshape(nk, 1)                   # (nk, 1)
    p3 = jnp.concatenate(
        [jnp.asarray(w3, jnp.float32).reshape(1, nk),
         jnp.asarray(b3, jnp.float32).reshape(1, 1)], axis=1)           # (1, nk+1)

    cost = pl.CostEstimate(
        flops=2 * m_pad * (2 * nk + nk * nk + nk),
        transcendentals=2 * m_pad * nk,          # two tanh layers on the EUP
        bytes_accessed=4 * (3 * m_pad + 3 * nk + nk * nk + 2 * nk + 1),
    )

    out = pl.pallas_call(
        nnkernel_kernel,
        out_shape=jax.ShapeDtypeStruct((1, m_pad), jnp.float32),
        grid_spec=pltpu.PrefetchScalarGridSpec(
            num_scalar_prefetch=0,
            grid=(grid_m,),
            in_specs=[
                pl.BlockSpec((2, tm), lambda i: (0, i)),        # xy (points on lanes)
                pl.BlockSpec((nk, 3), lambda i: (0, 0)),        # [w1x|w1y|b1]
                pl.BlockSpec((nk, nk), lambda i: (0, 0)),       # w2
                pl.BlockSpec((nk, 1), lambda i: (0, 0)),        # b2
                pl.BlockSpec((1, nk + 1), lambda i: (0, 0)),    # [w3|b3]
            ],
            out_specs=pl.BlockSpec((1, tm), lambda i: (0, i)),  # lane-dense output
        ),
        compiler_params=pltpu.CompilerParams(dimension_semantics=("parallel",)),
        cost_estimate=cost,
    )(xy, p1, w2c, b2c, p3)

    return out[0, :M].reshape(orig_shape)


def nnkernel_reference(x, y, w1, b1, w2, b2, w3, b3):
    """Pure-JAX reference mirroring the PyTorch forward."""
    orig_shape = x.shape
    xy = jnp.stack([jnp.ravel(x), jnp.ravel(y)], axis=1)                # (M, 2)
    z = jnp.tanh(xy @ w1.T + b1)
    z = jnp.tanh(z @ w2.T + b2)
    z = z @ w3.T + b3                                                   # (M, 1)
    return z.reshape(orig_shape)


if __name__ == "__main__":
    key = jax.random.PRNGKey(0)
    ks = jax.random.split(key, 7)

    n_kernel = 32

    # 3-layer MLP parameters (deterministic small random values so the
    # numerical check is non-trivial).
    w1 = 0.5 * jax.random.normal(ks[0], (n_kernel, 2), dtype=jnp.float32)
    b1 = 0.1 * jax.random.normal(ks[1], (n_kernel,), dtype=jnp.float32)
    w2 = (1.0 / np.sqrt(n_kernel)) * jax.random.normal(ks[2], (n_kernel, n_kernel), dtype=jnp.float32)
    b2 = 0.1 * jax.random.normal(ks[3], (n_kernel,), dtype=jnp.float32)
    w3 = (1.0 / np.sqrt(n_kernel)) * jax.random.normal(ks[4], (1, n_kernel), dtype=jnp.float32)
    b3 = 0.1 * jax.random.normal(ks[5], (1,), dtype=jnp.float32)

    # Case 1: 2D meshgrid input (how SPINN evaluates the kernel net on a grid).
    nx = ny = 32
    xs = jnp.linspace(0.0, 1.0, nx, dtype=jnp.float32)
    ys = jnp.linspace(0.0, 1.0, ny, dtype=jnp.float32)
    X, Y = jnp.meshgrid(xs, ys)                         # (32, 32) each, M = 1024

    out1 = nnkernel_forward(X, Y, w1, b1, w2, b2, w3, b3, tm=256)
    out1 = jax.block_until_ready(out1)
    ref1 = nnkernel_reference(X, Y, w1, b1, w2, b2, w3, b3)
    np.testing.assert_allclose(np.asarray(out1), np.asarray(ref1), rtol=1e-5, atol=1e-5)

    # Case 2: ragged 1-D input (M not a multiple of tm -> padded last block).
    xr = jax.random.uniform(ks[6], (100,), dtype=jnp.float32)
    yr = jax.random.uniform(jax.random.fold_in(ks[6], 1), (100,), dtype=jnp.float32)
    out2 = nnkernel_forward(xr, yr, w1, b1, w2, b2, w3, b3, tm=256)
    out2 = jax.block_until_ready(out2)
    ref2 = nnkernel_reference(xr, yr, w1, b1, w2, b2, w3, b3)
    np.testing.assert_allclose(np.asarray(out2), np.asarray(ref2), rtol=1e-5, atol=1e-5)

    print("KERNEL_OK")
</pallas_src>

<mosaic_0001>
module attributes {stable_mosaic.version = 11 : i64} {
  func.func @nnkernel_kernel(%arg0: i32, %arg1: memref<2x256xf32, #tpu.memory_space<vmem>>, %arg2: memref<32x3xf32, #tpu.memory_space<vmem>>, %arg3: memref<32x32xf32, #tpu.memory_space<vmem>>, %arg4: memref<32x1xf32, #tpu.memory_space<vmem>>, %arg5: memref<1x33xf32, #tpu.memory_space<vmem>>, %arg6: memref<1x256xf32, #tpu.memory_space<vmem>>) attributes {dimension_semantics = [#tpu.dimension_semantics<parallel>], iteration_bounds = array<i64: 4>, scalar_prefetch = 0 : i64, scratch_operands = 0 : i64, tpu.core_type = #tpu.core_type<tc>, window_params = [{transform_indices = @transform_0, window_bounds = array<i64: 2, 256>}, {pipeline_mode = #tpu.pipeline_mode<synchronous>, transform_indices = @transform_1, window_bounds = array<i64: 32, 3>}, {pipeline_mode = #tpu.pipeline_mode<synchronous>, transform_indices = @transform_2, window_bounds = array<i64: 32, 32>}, {pipeline_mode = #tpu.pipeline_mode<synchronous>, transform_indices = @transform_3, window_bounds = array<i64: 32, 1>}, {pipeline_mode = #tpu.pipeline_mode<synchronous>, transform_indices = @transform_4, window_bounds = array<i64: 1, 33>}, {transform_indices = @transform_5, window_bounds = array<i64: 1, 256>}]} {
    %c0 = arith.constant 0 : index
    %c0_0 = arith.constant 0 : index
    %0 = vector.load %arg1[%c0, %c0_0] : memref<2x256xf32, #tpu.memory_space<vmem>>, vector<1x256xf32>
    %c1 = arith.constant 1 : index
    %c0_1 = arith.constant 0 : index
    %1 = vector.load %arg1[%c1, %c0_1] : memref<2x256xf32, #tpu.memory_space<vmem>>, vector<1x256xf32>
    %c0_2 = arith.constant 0 : index
    %c0_3 = arith.constant 0 : index
    %2 = vector.load %arg2[%c0_2, %c0_3] : memref<32x3xf32, #tpu.memory_space<vmem>>, vector<32x3xf32>
    %3 = vector.extract_strided_slice %2 {offsets = [0, 0], sizes = [32, 1], strides = [1, 1]} : vector<32x3xf32> to vector<32x1xf32>
    %4 = vector.broadcast %3 : vector<32x1xf32> to vector<32x256xf32>
    %5 = vector.broadcast %0 : vector<1x256xf32> to vector<32x256xf32>
    %6 = arith.mulf %4, %5 : vector<32x256xf32>
    %7 = vector.extract_strided_slice %2 {offsets = [0, 1], sizes = [32, 1], strides = [1, 1]} : vector<32x3xf32> to vector<32x1xf32>
    %8 = vector.broadcast %7 : vector<32x1xf32> to vector<32x256xf32>
    %9 = vector.broadcast %1 : vector<1x256xf32> to vector<32x256xf32>
    %10 = arith.mulf %8, %9 : vector<32x256xf32>
    %11 = arith.addf %6, %10 : vector<32x256xf32>
    %12 = vector.extract_strided_slice %2 {offsets = [0, 2], sizes = [32, 1], strides = [1, 1]} : vector<32x3xf32> to vector<32x1xf32>
    %13 = vector.broadcast %12 : vector<32x1xf32> to vector<32x256xf32>
    %14 = arith.addf %11, %13 : vector<32x256xf32>
    %15 = math.tanh %14 : vector<32x256xf32>
    %c0_4 = arith.constant 0 : index
    %c0_5 = arith.constant 0 : index
    %16 = vector.load %arg3[%c0_4, %c0_5] : memref<32x32xf32, #tpu.memory_space<vmem>>, vector<32x32xf32>
    %cst = arith.constant dense<0.000000e+00> : vector<32x256xf32>
    %17 = tpu.matmul %16, %15, %cst {dimension_numbers = #tpu.dot_dimension_numbers<[1], [0], [0], [1], [0, 0, 1, 1], [], []>} : vector<32x32xf32>, vector<32x256xf32>, vector<32x256xf32> -> vector<32x256xf32>
    %c0_6 = arith.constant 0 : index
    %c0_7 = arith.constant 0 : index
    %18 = vector.load %arg4[%c0_6, %c0_7] : memref<32x1xf32, #tpu.memory_space<vmem>>, vector<32x1xf32>
    %19 = vector.broadcast %18 : vector<32x1xf32> to vector<32x256xf32>
    %20 = arith.addf %17, %19 : vector<32x256xf32>
    %21 = math.tanh %20 : vector<32x256xf32>
    %c0_8 = arith.constant 0 : index
    %c0_9 = arith.constant 0 : index
    %22 = vector.load %arg5[%c0_8, %c0_9] : memref<1x33xf32, #tpu.memory_space<vmem>>, vector<1x33xf32>
    %23 = vector.extract_strided_slice %22 {offsets = [0, 0], sizes = [1, 32], strides = [1, 1]} : vector<1x33xf32> to vector<1x32xf32>
    %cst_10 = arith.constant dense<0.000000e+00> : vector<1x256xf32>
    %24 = tpu.matmul %23, %21, %cst_10 {dimension_numbers = #tpu.dot_dimension_numbers<[1], [0], [0], [1], [0, 0, 1, 1], [], []>} : vector<1x32xf32>, vector<32x256xf32>, vector<1x256xf32> -> vector<1x256xf32>
    %25 = vector.extract_strided_slice %22 {offsets = [0, 32], sizes = [1, 1], strides = [1, 1]} : vector<1x33xf32> to vector<1x1xf32>
    %26 = vector.broadcast %25 : vector<1x1xf32> to vector<1x256xf32>
    %27 = arith.addf %24, %26 : vector<1x256xf32>
    %c0_11 = arith.constant 0 : index
    %c0_12 = arith.constant 0 : index
    %28 = vector.load %arg6[%c0_11, %c0_12] : memref<1x256xf32, #tpu.memory_space<vmem>>, vector<1x256xf32>
    tpu.vector_store %arg6[%c0_11, %c0_12], %27 {strides = array<i32>} : memref<1x256xf32, #tpu.memory_space<vmem>>, vector<1x256xf32>,
    return
  }
  func.func @transform_0(%arg0: i32) -> (i32, i32) {
    %c0_i32 = arith.constant 0 : i32
    %c0_i32_0 = arith.constant 0 : i32
    return %c0_i32, %arg0 : i32, i32
  }
  func.func @transform_1(%arg0: i32) -> (i32, i32) {
    %c0_i32 = arith.constant 0 : i32
    %c0_i32_0 = arith.constant 0 : i32
    %c0_i32_1 = arith.constant 0 : i32
    return %c0_i32, %c0_i32_0 : i32, i32
  }
  func.func @transform_2(%arg0: i32) -> (i32, i32) {
    %c0_i32 = arith.constant 0 : i32
    %c0_i32_0 = arith.constant 0 : i32
    %c0_i32_1 = arith.constant 0 : i32
    return %c0_i32, %c0_i32_0 : i32, i32
  }
  func.func @transform_3(%arg0: i32) -> (i32, i32) {
    %c0_i32 = arith.constant 0 : i32
    %c0_i32_0 = arith.constant 0 : i32
    %c0_i32_1 = arith.constant 0 : i32
    return %c0_i32, %c0_i32_0 : i32, i32
  }
  func.func @transform_4(%arg0: i32) -> (i32, i32) {
    %c0_i32 = arith.constant 0 : i32
    %c0_i32_0 = arith.constant 0 : i32
    %c0_i32_1 = arith.constant 0 : i32
    return %c0_i32, %c0_i32_0 : i32, i32
  }
  func.func @transform_5(%arg0: i32) -> (i32, i32) {
    %c0_i32 = arith.constant 0 : i32
    %c0_i32_0 = arith.constant 0 : i32
    return %c0_i32, %arg0 : i32, i32
  }
}

</mosaic_0001>

<llo_original>
// kernel: tpu_custom_call.1
$region0: #{tpu_custom_call.1}
  #allocation0 [shape = 'u32[]', space=smem, size = 0x4, offset = 0x4, fixed_abs, tag = 'smem constant byte address 0x4 - core index']
  #allocation1 [shape = 'u32[144,128]{1,0:T(1,128)}', space=vmem, size = 0x12000, scoped, tag = 'internal scratch']
  %s0 = inlined_call_operand.vmem [shape: f32[2,1024], index: 0, kind: input, shape index: {}]
  %s1 = inlined_call_operand.vmem [shape: f32[32,3], index: 1, kind: input, shape index: {}]
  %s2 = inlined_call_operand.vmem [shape: f32[32,32], index: 2, kind: input, shape index: {}]
  %s3 = inlined_call_operand.vmem [shape: f32[32,1], index: 3, kind: input, shape index: {}]
  %s4 = inlined_call_operand.vmem [shape: f32[1,33], index: 4, kind: input, shape index: {}]
  %s5 = inlined_call_operand.hbm [shape: f32[1,1024], index: 5, kind: output, shape index: {}]
  %s6 = sld [smem:[#allocation0]]
  $region53: #{tpu_custom_call.1} parent=0
    _
  %s8 = ssub.s32 1, %s6
  %s9 = scalar_select 0, %s8, %s6
  $region1: #{tpu_custom_call.1} parent=0
    #allocation2 [shape = 'u8[2048]{0}', space=vmem, size = 0x800, scoped, tag = 'output window, operand 0']
    #allocation3 [shape = 's32[2]{0}', space=sflag, size = 0x8, scoped, tag = 'scoped memory for tpu_custom_call.1']
    %10 = vsyncpa [#allocation3], 0
    %s11 = scalar_lea.sflag [#allocation3], 1
    %12 = vsyncpa %s11, 0
    loop: start=0, step=1, limit=6
    $region2: #{tpu_custom_call.1} parent=1 // loop_pre_header
      _
    $region3: #{tpu_custom_call.1} parent=1 // loop_header
      %s14 = sphi 0, %s18
      %p15 = scmp.ge.s32.totalorder %s14, 6
      %s24 = sphi 0, %s26
      %s27 = sphi 0, %s24
      %s28 = sphi 0, %s27
      %s44 = sphi 0, %s28
      %s48 = sphi 0, %s48
      %s50 = sphi 0, %s48
      %s51 = sphi 0, %s50
      %s65 = sphi 0, %s51
      %s69 = sphi 0, %s69
      %s71 = sphi 0, %s69
      %s72 = sphi 0, %s71
      %s86 = sphi 0, %s72
      %s90 = sphi 0, %s90
      %s92 = sphi 0, %s90
      %s93 = sphi 0, %s92
      %s107 = sphi 0, %s93
      %s111 = sphi 0, %s111
      %s113 = sphi 0, %s111
      %s114 = sphi 0, %s113
      %s128 = sphi 0, %s114
      %s134 = sphi 0, %s136
      %s137 = sphi 0, %s134
      %s138 = sphi 0, %s137
      %s154 = sphi 0, %s138
    $region4: #{tpu_custom_call.1} parent=1 // loop_header_branch
      %17 = sbr.rel (%p15) target = $region8
    $region5: #{tpu_custom_call.1} parent=1 // loop_body
      %s19 = ssub.s32 %s14, 1
      %s20 = ssub.s32 %s14, 2
      %s21 = sadd.s32 %s14, 1
      %s22 = ssub.s32 %s14, %s21
      %p23 = scmp.eq.s32.totalorder %s22, 0
      %s25 = sadd.s32 %s24, 1
      %s26 = scalar_select %p23, %s24, %s25
      %p29 = pneg %p23
      %p30 = scmp.eq.s32.totalorder %s14, 3
      %p31 = por %p29, %p30
      %p32 = scmp.ne.s32.totalorder %s24, %s27
      %p33 = scmp.eq.s32.totalorder %s14, 0
      %p34 = por %p32, %p33
      %p35 = scmp.ne.s32.totalorder %s24, %s27
      %p36 = scmp.eq.s32.totalorder %s19, 3
      %p37 = por %p35, %p36
      %p38 = scmp.ne.s32.totalorder %s27, %s28
      %p39 = scmp.eq.s32.totalorder %s19, 0
      %p40 = por %p38, %p39
      %p41 = scmp.ne.s32.totalorder %s27, %s28
      %p42 = scmp.eq.s32.totalorder %s20, 3
      %p43 = por %p41, %p42
      %p45 = scmp.ne.s32.totalorder %s28, %s44
      %p46 = scmp.eq.s32.totalorder %s20, 0
      %p47 = por %p45, %p46
      %s49 = sadd.s32 %s48, 1
      %p52 = scmp.eq.s32.totalorder %s14, 3
      %p53 = scmp.ne.s32.totalorder %s48, %s50
      %p54 = scmp.eq.s32.totalorder %s14, 0
      %p55 = por %p53, %p54
      %p56 = scmp.ne.s32.totalorder %s48, %s50
      %p57 = scmp.eq.s32.totalorder %s19, 3
      %p58 = por %p56, %p57
      %p59 = scmp.ne.s32.totalorder %s50, %s51
      %p60 = scmp.eq.s32.totalorder %s19, 0
      %p61 = por %p59, %p60
      %p62 = scmp.ne.s32.totalorder %s50, %s51
      %p63 = scmp.eq.s32.totalorder %s20, 3
      %p64 = por %p62, %p63
      %p66 = scmp.ne.s32.totalorder %s51, %s65
      %p67 = scmp.eq.s32.totalorder %s20, 0
      %p68 = por %p66, %p67
      %s70 = sadd.s32 %s69, 1
      %p73 = scmp.eq.s32.totalorder %s14, 3
      %p74 = scmp.ne.s32.totalorder %s69, %s71
      %p75 = scmp.eq.s32.totalorder %s14, 0
      %p76 = por %p74, %p75
      %p77 = scmp.ne.s32.totalorder %s69, %s71
      %p78 = scmp.eq.s32.totalorder %s19, 3
      %p79 = por %p77, %p78
      %p80 = scmp.ne.s32.totalorder %s71, %s72
      %p81 = scmp.eq.s32.totalorder %s19, 0
      %p82 = por %p80, %p81
      %p83 = scmp.ne.s32.totalorder %s71, %s72
      %p84 = scmp.eq.s32.totalorder %s20, 3
      %p85 = por %p83, %p84
      %p87 = scmp.ne.s32.totalorder %s72, %s86
      %p88 = scmp.eq.s32.totalorder %s20, 0
      %p89 = por %p87, %p88
      %s91 = sadd.s32 %s90, 1
      %p94 = scmp.eq.s32.totalorder %s14, 3
      %p95 = scmp.ne.s32.totalorder %s90, %s92
      %p96 = scmp.eq.s32.totalorder %s14, 0
      %p97 = por %p95, %p96
      %p98 = scmp.ne.s32.totalorder %s90, %s92
      %p99 = scmp.eq.s32.totalorder %s19, 3
      %p100 = por %p98, %p99
      %p101 = scmp.ne.s32.totalorder %s92, %s93
      %p102 = scmp.eq.s32.totalorder %s19, 0
      %p103 = por %p101, %p102
      %p104 = scmp.ne.s32.totalorder %s92, %s93
      %p105 = scmp.eq.s32.totalorder %s20, 3
      %p106 = por %p104, %p105
      %p108 = scmp.ne.s32.totalorder %s93, %s107
      %p109 = scmp.eq.s32.totalorder %s20, 0
      %p110 = por %p108, %p109
      %s112 = sadd.s32 %s111, 1
      %p115 = scmp.eq.s32.totalorder %s14, 3
      %p116 = scmp.ne.s32.totalorder %s111, %s113
      %p117 = scmp.eq.s32.totalorder %s14, 0
      %p118 = por %p116, %p117
      %p119 = scmp.ne.s32.totalorder %s111, %s113
      %p120 = scmp.eq.s32.totalorder %s19, 3
      %p121 = por %p119, %p120
      %p122 = scmp.ne.s32.totalorder %s113, %s114
      %p123 = scmp.eq.s32.totalorder %s19, 0
      %p124 = por %p122, %p123
      %p125 = scmp.ne.s32.totalorder %s113, %s114
      %p126 = scmp.eq.s32.totalorder %s20, 3
      %p127 = por %p125, %p126
      %p129 = scmp.ne.s32.totalorder %s114, %s128
      %p130 = scmp.eq.s32.totalorder %s20, 0
      %p131 = por %p129, %p130
      %s132 = ssub.s32 %s14, %s21
      %p133 = scmp.eq.s32.totalorder %s132, 0
      %s135 = sadd.s32 %s134, 1
      %s136 = scalar_select %p133, %s134, %s135
      %p139 = pneg %p133
      %p140 = scmp.eq.s32.totalorder %s14, 3
      %p141 = por %p139, %p140
      %p142 = scmp.ne.s32.totalorder %s134, %s137
      %p143 = scmp.eq.s32.totalorder %s14, 0
      %p144 = por %p142, %p143
      %p145 = scmp.ne.s32.totalorder %s134, %s137
      %p146 = scmp.eq.s32.totalorder %s19, 3
      %p147 = por %p145, %p146
      %p148 = scmp.ne.s32.totalorder %s137, %s138
      %p149 = scmp.eq.s32.totalorder %s19, 0
      %p150 = por %p148, %p149
      %p151 = scmp.ne.s32.totalorder %s137, %s138
      %p152 = scmp.eq.s32.totalorder %s20, 3
      %p153 = por %p151, %p152
      %p155 = scmp.ne.s32.totalorder %s138, %s154
      %p156 = scmp.eq.s32.totalorder %s20, 0
      %p157 = por %p155, %p156
      %p158 = scmp.le.s32.totalorder 1, %s14
      %p159 = scmp.lt.s32.totalorder %s14, 5
      %p160 = pnand %p158, %p159
      %p161 = pneg %p160
      // Predicated region
      $region9: #{tpu_custom_call.1} parent=5 // pred_check
        _
      $region10: #{tpu_custom_call.1} parent=5 // pred_check_branch
        %163 = sbr.rel (%p160) target = $region12
      $region11: #{tpu_custom_call.1} parent=5 // pred_region
        %s164 = ssub.s32 %s14, 1
        // Predicated region
        $region13: #{tpu_custom_call.1} parent=11 // pred_check
          %p165 = pneg %p61
        $region14: #{tpu_custom_call.1} parent=11 // pred_check_branch
          %167 = sbr.rel (%p165) target = $region16
        $region15: #{tpu_custom_call.1} parent=11 // pred_region
          _
        $region16: #{tpu_custom_call.1} parent=11 // pred_fallthru
          _
        // Predicated region
        $region17: #{tpu_custom_call.1} parent=11 // pred_check
          %p168 = pneg %p82
        $region18: #{tpu_custom_call.1} parent=11 // pred_check_branch
          %170 = sbr.rel (%p168) target = $region20
        $region19: #{tpu_custom_call.1} parent=11 // pred_region
          _
        $region20: #{tpu_custom_call.1} parent=11 // pred_fallthru
          _
        // Predicated region
        $region21: #{tpu_custom_call.1} parent=11 // pred_check
          %p171 = pneg %p103
        $region22: #{tpu_custom_call.1} parent=11 // pred_check_branch
          %173 = sbr.rel (%p171) target = $region24
        $region23: #{tpu_custom_call.1} parent=11 // pred_region
          _
        $region24: #{tpu_custom_call.1} parent=11 // pred_fallthru
          _
        // Predicated region
        $region25: #{tpu_custom_call.1} parent=11 // pred_check
          %p174 = pneg %p124
        $region26: #{tpu_custom_call.1} parent=11 // pred_check_branch
          %176 = sbr.rel (%p174) target = $region28
        $region27: #{tpu_custom_call.1} parent=11 // pred_region
          _
        $region28: #{tpu_custom_call.1} parent=11 // pred_fallthru
          _
      $region12: #{tpu_custom_call.1} parent=5 // pred_fallthru
        _
      %p177 = scmp.lt.s32.totalorder %s14, 4
      // Predicated region
      $region29: #{tpu_custom_call.1} parent=5 // pred_check
        %p178 = pneg %p177
      $region30: #{tpu_custom_call.1} parent=5 // pred_check_branch
        %180 = sbr.rel (%p178) target = $region32
      $region31: #{tpu_custom_call.1} parent=5 // pred_region
        // Predicated region
        $region33: #{tpu_custom_call.1} parent=31 // pred_check
          %p181 = pneg %p34
        $region34: #{tpu_custom_call.1} parent=31 // pred_check_branch
          %183 = sbr.rel (%p181) target = $region36
        $region35: #{tpu_custom_call.1} parent=31 // pred_region
          %s184 = smul.u32 2, %s14
          %p185 = scmp.lt.s32.totalorder %s184, 7
          %s186 = scalar_select %p185, %s184, 7
          %s187 = smul.addr %s186, 2
          %s188 = scalar_lea.vmem %s0, %s187
          %s189 = smul.u32 2, %s14
        $region36: #{tpu_custom_call.1} parent=31 // pred_fallthru
          _
      $region32: #{tpu_custom_call.1} parent=5 // pred_fallthru
        _
      %p190 = scmp.le.s32.totalorder 1, %s14
      %p191 = scmp.lt.s32.totalorder %s14, 5
      %p192 = pnand %p190, %p191
      %p193 = pneg %p192
      // Predicated region
      $region37: #{tpu_custom_call.1} parent=5 // pred_check
        _
      $region38: #{tpu_custom_call.1} parent=5 // pred_check_branch
        %195 = sbr.rel (%p192) target = $region40
      $region39: #{tpu_custom_call.1} parent=5 // pred_region
        %s196 = ssub.s32 %s14, 1
        %s197 = smul.u32 2, %s19
        %p198 = scmp.lt.s32.totalorder %s197, 7
        %s199 = scalar_select %p198, %s197, 7
        %s200 = smul.addr %s199, 2
        %s201 = scalar_lea.vmem %s0, %s200
        %p202 = pneg %p40
        %p203 = pneg %p37
        %p204 = pneg %p61
        %p205 = pneg %p58
        %p206 = pneg %p82
        %p207 = pneg %p79
        %p208 = pneg %p103
        %p209 = pneg %p100
        %p210 = pneg %p124
        %p211 = pneg %p121
        %p212 = pneg %p150
        %p213 = pneg %p147
        %s214 = sand.u32 %s137, 1
        %s215 = scalar_lea.sflag [#allocation3], %s214
        %s216 = sand.u32 %s137, 1
        %s217 = smul.addr %s216, 2
        %s218 = scalar_lea.vmem [#allocation2], %s217
        %s219 = smul.u32 2, %s19
        %p220 = scmp.lt.s32.totalorder %s219, 7
        %s221 = scalar_select %p220, %s219, 7
        %s222 = smul.addr %s221, 2
        %s223 = scalar_lea.vmem %s0, %s222
        %s224 = smul.u32 2, %s19
        %s225 = smul.u32 2, %s19
        %v226 = vld [vmem:[%s223] ss:$2 sm:$0x3]
        %s227 = scalar_lea.vmem %s223, 1
        %v228 = vld [vmem:[%s227] ss:$2 sm:$0x3]
        %v229 = vld [vmem:[%s1] sm:$0xff]
        %v230 = vld [vmem:[%s1 + $0x8] sm:$0xff]
        %v231 = vld [vmem:[%s1 + $0x10] sm:$0xff]
        %v232 = vld [vmem:[%s1 + $0x18] sm:$0xff]
        %234 = vset.pattern.permute.xlu0 0
        %235 = vperm.xlu0 %234, %v229
        %v236 = vpop.permute.xlu0 %235
        %239 = vset.pattern.permute.xlu0 0
        %240 = vperm.xlu0 %239, %v230
        %v241 = vpop.permute.xlu0 %240
        %244 = vset.pattern.permute.xlu0 0
        %245 = vperm.xlu0 %244, %v231
        %v246 = vpop.permute.xlu0 %245
        %249 = vset.pattern.permute.xlu0 0
        %250 = vperm.xlu0 %249, %v232
        %v251 = vpop.permute.xlu0 %250
        %v254 = vlaneseq
        %v255 = vshrl.u32 %v254, 7
        %v256 = vsub.s32 0, %v255
        %v257 = vrot.slane %v226, %v256
        %v258 = vlaneseq
        %v259 = vshrl.u32 %v258, 7
        %v260 = vsub.s32 1, %v259
        %v261 = vrot.slane %v226, %v260
        %v264 = vmul.f32 %v236, %v257
        %v265 = vmul.f32 %v236, %v261
        %v266 = vmul.f32 %v241, %v257
        %v267 = vmul.f32 %v241, %v261
        %v268 = vmul.f32 %v246, %v257
        %v269 = vmul.f32 %v246, %v261
        %v270 = vmul.f32 %v251, %v257
        %v271 = vmul.f32 %v251, %v261
        %272 = vset.pattern.permute.xlu0 1
        %273 = vperm.xlu0 %272, %v229
        %v274 = vpop.permute.xlu0 %273
        %276 = vset.pattern.permute.xlu0 1
        %277 = vperm.xlu0 %276, %v230
        %v278 = vpop.permute.xlu0 %277
        %280 = vset.pattern.permute.xlu0 1
        %281 = vperm.xlu0 %280, %v231
        %v282 = vpop.permute.xlu0 %281
        %284 = vset.pattern.permute.xlu0 1
        %285 = vperm.xlu0 %284, %v232
        %v286 = vpop.permute.xlu0 %285
        %v289 = vlaneseq
        %v290 = vshrl.u32 %v289, 7
        %v291 = vsub.s32 0, %v290
        %v292 = vrot.slane %v228, %v291
        %v293 = vlaneseq
        %v294 = vshrl.u32 %v293, 7
        %v295 = vsub.s32 1, %v294
        %v296 = vrot.slane %v228, %v295
        %v299 = vmul.f32 %v274, %v292
        %v300 = vmul.f32 %v274, %v296
        %v301 = vmul.f32 %v278, %v292
        %v302 = vmul.f32 %v278, %v296
        %v303 = vmul.f32 %v282, %v292
        %v304 = vmul.f32 %v282, %v296
        %v305 = vmul.f32 %v286, %v292
        %v306 = vmul.f32 %v286, %v296
        %v307 = vadd.f32 %v264, %v299
        %v308 = vadd.f32 %v265, %v300
        %v309 = vadd.f32 %v266, %v301
        %v310 = vadd.f32 %v267, %v302
        %v311 = vadd.f32 %v268, %v303
        %v312 = vadd.f32 %v269, %v304
        %v313 = vadd.f32 %v270, %v305
        %v314 = vadd.f32 %v271, %v306
        %315 = vset.pattern.permute.xlu0 2
        %316 = vperm.xlu0 %315, %v229
        %v317 = vpop.permute.xlu0 %316
        %319 = vset.pattern.permute.xlu0 2
        %320 = vperm.xlu0 %319, %v230
        %v321 = vpop.permute.xlu0 %320
        %323 = vset.pattern.permute.xlu0 2
        %324 = vperm.xlu0 %323, %v231
        %v325 = vpop.permute.xlu0 %324
        %327 = vset.pattern.permute.xlu0 2
        %328 = vperm.xlu0 %327, %v232
        %v329 = vpop.permute.xlu0 %328
        %v331 = vadd.f32 %v307, %v317
        %v332 = vadd.f32 %v308, %v317
        %v333 = vadd.f32 %v309, %v321
        %v334 = vadd.f32 %v310, %v321
        %v335 = vadd.f32 %v311, %v325
        %v336 = vadd.f32 %v312, %v325
        %v337 = vadd.f32 %v313, %v329
        %v338 = vadd.f32 %v314, %v329
        %v339 = vtanh.pop %v331
        %v340 = vtanh.pop %v332
        %v341 = vtanh.pop %v333
        %v342 = vtanh.pop %v334
        %v343 = vtanh.pop %v335
        %v344 = vtanh.pop %v336
        %v345 = vtanh.pop %v337
        %v346 = vtanh.pop %v338
        %v347 = vld [vmem:[%s2] sm:$0xff]
        %v348 = vld [vmem:[%s2 + $0x8] sm:$0xff]
        %v349 = vld [vmem:[%s2 + $0x10] sm:$0xff]
        %v350 = vld [vmem:[%s2 + $0x18] sm:$0xff]
        %v351 = vld [vmem:[%s3] sm:$0xff]
        %v352 = vld [vmem:[%s3 + $0x8] sm:$0xff]
        %v353 = vld [vmem:[%s3 + $0x10] sm:$0xff]
        %v354 = vld [vmem:[%s3 + $0x18] sm:$0xff]
        %356 = vset.pattern.permute.xlu0 0
        %357 = vperm.xlu0 %356, %v351
        %v358 = vpop.permute.xlu0 %357
        %361 = vset.pattern.permute.xlu0 0
        %362 = vperm.xlu0 %361, %v352
        %v363 = vpop.permute.xlu0 %362
        %366 = vset.pattern.permute.xlu0 0
        %367 = vperm.xlu0 %366, %v353
        %v368 = vpop.permute.xlu0 %367
        %371 = vset.pattern.permute.xlu0 0
        %372 = vperm.xlu0 %371, %v354
        %v373 = vpop.permute.xlu0 %372
        %vm375 = vcmask 261120
        %v377 = vsel %vm375, %v347, 0
        %v380 = vsel %vm375, %v348, 0
        %v383 = vsel %vm375, %v349, 0
        %v386 = vsel %vm375, %v350, 0
        %388 = vmatprep.subr.mxu0 %v340
        %389 = vmatpush1.msra.mxu0 %v339
        %390 = vmatprep.subr.mxu0 %v342
        %391 = vmatpush1.msra.mxu0 %v341
        %392 = vmatprep.subr.mxu0 %v344
        %393 = vmatpush1.msra.mxu0 %v343
        %394 = vmatprep.subr.mxu0 %v346
        %395 = vmatpush1.msra.mxu0 %v345
        %396 = vmatprep.subr.mxu0 0.0
        %397 = vmatpush1.msra.mxu0 0.0
        %398 = vmatprep.subr.mxu0 0.0
        %399 = vmatpush1.msra.mxu0 0.0
        %400 = vmatprep.subr.mxu0 0.0
        %401 = vmatpush1.msra.mxu0 0.0
        %402 = vmatprep.subr.mxu0 0.0
        %403 = vmatpush1.msra.mxu0 0.0
        %404 = vmatprep.subr.mxu0 0.0
        %405 = vmatpush1.msra.mxu0 0.0
        %406 = vmatprep.subr.mxu0 0.0
        %407 = vmatpush1.msra.mxu0 0.0
        %408 = vmatprep.subr.mxu0 0.0
        %409 = vmatpush1.msra.mxu0 0.0
        %410 = vmatprep.subr.mxu0 0.0
        %411 = vmatpush1.msra.mxu0 0.0
        %412 = vmatprep.subr.mxu0 0.0
        %413 = vmatpush1.msra.mxu0 0.0
        %414 = vmatprep.subr.mxu0 0.0
        %415 = vmatpush1.msra.mxu0 0.0
        %416 = vmatprep.subr.mxu0 0.0
        %417 = vmatpush1.msra.mxu0 0.0
        %418 = vmatprep.subr.mxu0 0.0
        %419 = vmatpush1.msra.mxu0 0.0
        %420 = vmatprep.subr.mxu0 0.0
        %421 = vmatpush1.msra.mxu0 0.0
        %422 = vmatprep.subr.mxu0 0.0
        %423 = vmatpush1.msra.mxu0 0.0
        %424 = vmatprep.subr.mxu0 0.0
        %425 = vmatpush1.msra.mxu0 0.0
        %426 = vmatprep.subr.mxu0 0.0
        %427 = vmatpush1.msra.mxu0 0.0
        %428 = vmatprep.subr.mxu0 0.0
        %429 = vmatpush1.msra.mxu0 0.0
        %430 = vmatprep.subr.mxu0 0.0
        %431 = vmatpush1.msra.mxu0 0.0
        %432 = vmatprep.subr.mxu0 0.0
        %433 = vmatpush1.msra.mxu0 0.0
        %434 = vmatprep.subr.mxu0 0.0
        %435 = vmatpush1.msra.mxu0 0.0
        %436 = vmatprep.subr.mxu0 0.0
        %437 = vmatpush1.msra.mxu0 0.0
        %438 = vmatprep.subr.mxu0 0.0
        %439 = vmatpush1.msra.mxu0 0.0
        %440 = vmatprep.subr.mxu0 0.0
        %441 = vmatpush1.msra.mxu0 0.0
        %442 = vmatprep.subr.mxu0 0.0
        %443 = vmatpush1.msra.mxu0 0.0
        %444 = vmatprep.subr.mxu0 0.0
        %445 = vmatpush1.msra.mxu0 0.0
        %446 = vmatprep.subr.mxu0 0.0
        %447 = vmatpush1.msra.mxu0 0.0
        %448 = vmatprep.subr.mxu0 0.0
        %449 = vmatpush1.msra.mxu0 0.0
        %450 = vmatprep.subr.mxu0 0.0
        %451 = vmatpush1.msra.mxu0 0.0
        %452 = vmatprep.mubr.f32.mxu0 0.0
        %453 = vmatmul.mubr.f32.gmra.mrb[0].mxu0 %v377
        %v454 = vpop.f32.mrb[0].mxu0
        %v455 = vadd.f32 %v358, %v454
        %v456 = vpop.f32.mrb[0].mxu0
        %v457 = vadd.f32 %v358, %v456
        %458 = vmatprep.mubr.f32.mxu0 0.0
        %459 = vmatmul.mubr.f32.gmra.mrb[0].mxu0 %v380
        %v460 = vpop.f32.mrb[0].mxu0
        %v461 = vadd.f32 %v363, %v460
        %v462 = vpop.f32.mrb[0].mxu0
        %v463 = vadd.f32 %v363, %v462
        %464 = vmatprep.mubr.f32.mxu0 0.0
        %465 = vmatmul.mubr.f32.gmra.mrb[0].mxu0 %v383
        %v466 = vpop.f32.mrb[0].mxu0
        %v467 = vadd.f32 %v368, %v466
        %v468 = vpop.f32.mrb[0].mxu0
        %v469 = vadd.f32 %v368, %v468
        %470 = vmatprep.mubr.f32.mxu0 0.0
        %471 = vmatmul.mubr.f32.gmra.mrb[0].mxu0 %v386
        %v472 = vpop.f32.mrb[0].mxu0
        %v473 = vadd.f32 %v373, %v472
        %v474 = vpop.f32.mrb[0].mxu0
        %v475 = vadd.f32 %v373, %v474
        %476 = vdwg.mxu0
        %v477 = vtanh.pop %v455
        %v478 = vtanh.pop %v457
        %v479 = vtanh.pop %v461
        %v480 = vtanh.pop %v463
        %v481 = vtanh.pop %v467
        %v482 = vtanh.pop %v469
        %v483 = vtanh.pop %v473
        %v484 = vtanh.pop %v475
        %v485 = vld [vmem:[%s4] sm:$0x1]
        %487 = vset.pattern.permute.xlu0 32
        %488 = vperm.xlu0 %487, %v485
        %v489 = vpop.permute.xlu0 %488
        %v491 = vlaneseq
        %v492 = vshrl.u32 %v491, 7
        %v493 = vsub.s32 0, %v492
        %v494 = vrot.slane %v489, %v493
        %v495 = vsel %vm375, %v485, 0
        %497 = vmatprep.subr.mxu0 %v478
        %498 = vmatpush1.msra.mxu0 %v477
        %499 = vmatprep.subr.mxu0 %v480
        %500 = vmatpush1.msra.mxu0 %v479
        %501 = vmatprep.subr.mxu0 %v482
        %502 = vmatpush1.msra.mxu0 %v481
        %503 = vmatprep.subr.mxu0 %v484
        %504 = vmatpush1.msra.mxu0 %v483
        %505 = vmatprep.subr.mxu0 0.0
        %506 = vmatpush1.msra.mxu0 0.0
        %507 = vmatprep.subr.mxu0 0.0
        %508 = vmatpush1.msra.mxu0 0.0
        %509 = vmatprep.subr.mxu0 0.0
        %510 = vmatpush1.msra.mxu0 0.0
        %511 = vmatprep.subr.mxu0 0.0
        %512 = vmatpush1.msra.mxu0 0.0
        %513 = vmatprep.subr.mxu0 0.0
        %514 = vmatpush1.msra.mxu0 0.0
        %515 = vmatprep.subr.mxu0 0.0
        %516 = vmatpush1.msra.mxu0 0.0
        %517 = vmatprep.subr.mxu0 0.0
        %518 = vmatpush1.msra.mxu0 0.0
        %519 = vmatprep.subr.mxu0 0.0
        %520 = vmatpush1.msra.mxu0 0.0
        %521 = vmatprep.subr.mxu0 0.0
        %522 = vmatpush1.msra.mxu0 0.0
        %523 = vmatprep.subr.mxu0 0.0
        %524 = vmatpush1.msra.mxu0 0.0
        %525 = vmatprep.subr.mxu0 0.0
        %526 = vmatpush1.msra.mxu0 0.0
        %527 = vmatprep.subr.mxu0 0.0
        %528 = vmatpush1.msra.mxu0 0.0
        %529 = vmatprep.subr.mxu0 0.0
        %530 = vmatpush1.msra.mxu0 0.0
        %531 = vmatprep.subr.mxu0 0.0
        %532 = vmatpush1.msra.mxu0 0.0
        %533 = vmatprep.subr.mxu0 0.0
        %534 = vmatpush1.msra.mxu0 0.0
        %535 = vmatprep.subr.mxu0 0.0
        %536 = vmatpush1.msra.mxu0 0.0
        %537 = vmatprep.subr.mxu0 0.0
        %538 = vmatpush1.msra.mxu0 0.0
        %539 = vmatprep.subr.mxu0 0.0
        %540 = vmatpush1.msra.mxu0 0.0
        %541 = vmatprep.subr.mxu0 0.0
        %542 = vmatpush1.msra.mxu0 0.0
        %543 = vmatprep.subr.mxu0 0.0
        %544 = vmatpush1.msra.mxu0 0.0
        %545 = vmatprep.subr.mxu0 0.0
        %546 = vmatpush1.msra.mxu0 0.0
        %547 = vmatprep.subr.mxu0 0.0
        %548 = vmatpush1.msra.mxu0 0.0
        %549 = vmatprep.subr.mxu0 0.0
        %550 = vmatpush1.msra.mxu0 0.0
        %551 = vmatprep.subr.mxu0 0.0
        %552 = vmatpush1.msra.mxu0 0.0
        %553 = vmatprep.subr.mxu0 0.0
        %554 = vmatpush1.msra.mxu0 0.0
        %555 = vmatprep.subr.mxu0 0.0
        %556 = vmatpush1.msra.mxu0 0.0
        %557 = vmatprep.subr.mxu0 0.0
        %558 = vmatpush1.msra.mxu0 0.0
        %559 = vmatprep.subr.mxu0 0.0
        %560 = vmatpush1.msra.mxu0 0.0
        %561 = vmatprep.mubr.f32.mxu0 0.0
        %562 = vmatmul.mubr.f32.gmra.mrb[0].mxu0 %v495
        %v563 = vpop.f32.mrb[0].mxu0
        %v564 = vadd.f32 %v494, %v563
        %v565 = vpop.f32.mrb[0].mxu0
        %v566 = vadd.f32 %v494, %v565
        %567 = vdwg.mxu0
        %v570 = vcombine.low %v564, %v566
        %v572 = vunpack.c.l.s4 1966171168
        %v573 = vunpack.c.0.s8 %v572
        %v574 = vlaneseq
        %v575 = vshrl.u32 %v574, 7
        %v576 = vsub.s32 %v573, %v575
        %v577 = vrot.slane %v570, %v576
        %v579 = vunpack.c.l.s4 1966171168
        %v580 = vunpack.c.0.s8 %v579
        %v581 = vlaneseq
        %v582 = vshrl.u32 %v581, 7
        %v583 = vsub.s32 %v580, %v582
        %v584 = vrot.slane %v577, %v583
        %v586 = vlaneseq
        %vm587 = vcmp.ge.s32.totalorder %v586, 0
        %vm588 = vcmp.lt.s32.totalorder %v586, 256
        %vm589 = vmand %vm587, %vm588
        %590 = vst.msk [vmem:[%s218] sm:$0x3] %vm589, %v584
        %s591 = sand.u32 %s137, 1
        %s592 = scalar_lea.sflag [#allocation3], %s591
        %s593 = sand.u32 %s137, 1
        %s594 = smul.addr %s593, 2
        %s595 = scalar_lea.vmem [#allocation2], %s594
        // Predicated region
        $region41: #{tpu_custom_call.1} parent=39 // pred_check
          %p596 = pneg %p147
        $region42: #{tpu_custom_call.1} parent=39 // pred_check_branch
          %598 = sbr.rel (%p596) target = $region44
        $region43: #{tpu_custom_call.1} parent=39 // pred_region
          %s599 = smul.u32 2, %s19
          %s601 = ssub.s32 32, 32
          %602 = vsyncadd %s592, %s601
          %s603 = smul.addr %s599, 16
          %s604 = scalar_lea.hbm %s5, %s603
          %s606 = sshll.u32 %s595, 4
          %s607 = int_to_ptr.vmem [resolvable:$true] %s606
          %609 = dma.vmem_to_hbm [thread:$0]  %s607, 32, %s604, %s592
        $region44: #{tpu_custom_call.1} parent=39 // pred_fallthru
          _
      $region40: #{tpu_custom_call.1} parent=5 // pred_fallthru
        _
      %p610 = scmp.le.s32.totalorder 2, %s14
      // Predicated region
      $region45: #{tpu_custom_call.1} parent=5 // pred_check
        %p611 = pneg %p610
      $region46: #{tpu_custom_call.1} parent=5 // pred_check_branch
        %613 = sbr.rel (%p611) target = $region48
      $region47: #{tpu_custom_call.1} parent=5 // pred_region
        %s614 = ssub.s32 %s14, 2
        // Predicated region
        $region49: #{tpu_custom_call.1} parent=47 // pred_check
          %p615 = pneg %p153
        $region50: #{tpu_custom_call.1} parent=47 // pred_check_branch
          %617 = sbr.rel (%p615) target = $region52
        $region51: #{tpu_custom_call.1} parent=47 // pred_region
          %s618 = sand.u32 %s138, 1
          %s619 = scalar_lea.sflag [#allocation3], %s618
          %s620 = sand.u32 %s138, 1
          %s621 = smul.addr %s620, 2
          %s622 = scalar_lea.vmem [#allocation2], %s621
          %623 = dma.done %s619, 32
        $region52: #{tpu_custom_call.1} parent=47 // pred_fallthru
          _
      $region48: #{tpu_custom_call.1} parent=5 // pred_fallthru
        _
    $region6: #{tpu_custom_call.1} parent=1 // loop_footer
      %s18 = sadd.s32 1, %s14
    $region7: #{tpu_custom_call.1} parent=1 // loop_footer_branch
      %13 = sbr.rel target = $region3
    $region8: #{tpu_custom_call.1} parent=1 // loop_exit
      _
    %624 = vsyncpa [#allocation3], 1
    %s625 = scalar_lea.sflag [#allocation3], 1
    %626 = vsyncpa %s625, 1

</llo_original>
